<compile_context>
chip_gen: v7x
topology: tpu7x:2x2x1
jax: 0.10.0
libtpu: 0.0.40
codegen_flags: <defaults>
</compile_context>

<pallas_src>
import functools

import jax
import jax.numpy as jnp
from jax import lax
from jax.experimental import pallas as pl
from jax.experimental.pallas import tpu as pltpu

LANE = 128


def _round_up(a, b):
    return (a + b - 1) // b * b


def attention3d_kernel(x_ref, sel_ref, w1rep_ref, w2t_ref, o_ref, acc_ref, *,
                       s_total, s_tile, n_outer, inner, inv_s, need_mask):
    # x_ref:     (1, R, s_tile)  streaming input block (R = batches_per_group * C)
    # sel_ref:   (Bg, R)         row -> batch one-hot selector (f32)
    # w1rep_ref: (R, hidden)     fc1 weight, pre-transposed & tiled per batch row
    # w2t_ref:   (hidden, K)     fc2 weight, pre-transposed, 1/temperature folded
    # o_ref:     (1, Bg, K)      softmax output block
    # acc_ref:   (R, 128) f32    per-lane partial sums (persists across S tiles)
    s = pl.program_id(1)

    @pl.when(s == 0)
    def _init():
        acc_ref[...] = jnp.zeros_like(acc_ref)

    if need_mask:
        lane_iota = lax.broadcasted_iota(jnp.int32, acc_ref.shape, 1)  # hoisted
        valid = s_total - s * s_tile       # number of real elements in this tile

    # Streaming reduction: walk the lane axis in 128-wide slabs.  Each outer
    # iteration accumulates `inner` slabs in vregs and folds them into the VMEM
    # accumulator, keeping vreg pressure flat.  All of this is VPU filler that
    # hides under the x DMA (kernel is HBM-bandwidth bound).
    @pl.loop(0, n_outer)
    def _outer(t):
        base = pl.multiple_of(t * (inner * LANE), LANE)
        part = jnp.zeros(acc_ref.shape, jnp.float32)
        for u in range(inner):             # small static unroll
            off = base + u * LANE
            v = x_ref[0, :, pl.ds(off, LANE)].astype(jnp.float32)
            if need_mask:
                v = jnp.where(lane_iota < (valid - off), v, 0.0)
            part = part + v
        acc_ref[...] += part

    @pl.when(s == pl.num_programs(1) - 1)
    def _finalize():
        # Single cross-lane (XLU) reduce for the whole kernel, then the tiny
        # epilogue.  Exact divide in the softmax for parity with the reference.
        pooled = jnp.sum(acc_ref[...], axis=-1, keepdims=True) * inv_s      # (R, 1)
        h = jnp.dot(sel_ref[...], pooled * w1rep_ref[...],
                    preferred_element_type=jnp.float32)                     # (Bg, hidden)
        h = jnp.maximum(h, 0.0)
        logits = jnp.dot(h, w2t_ref[...],
                         preferred_element_type=jnp.float32)                # (Bg, K)
        z = logits - jnp.max(logits, axis=-1, keepdims=True)
        e = jnp.exp(z)
        probs = e / jnp.sum(e, axis=-1, keepdims=True)
        o_ref[0, :, :] = probs.astype(o_ref.dtype)


def attention3d_forward(x, w1, w2, temperature):
    """x: (B, C, D, H, W); w1: (hidden, C); w2: (K, hidden) (PyTorch 1x1x1 conv weights)."""
    B, C, D, H, W = x.shape
    hidden = w1.shape[0]
    K = w2.shape[0]
    S = D * H * W
    itemsize = jnp.dtype(x.dtype).itemsize

    # Megacore: split batches into groups on a leading "parallel" grid axis, but
    # only when each group's row count stays a multiple of 8 (keeps sublanes dense).
    num_groups = 2 if (B % 2 == 0 and (B * C) % 16 == 0) else 1
    Bg = B // num_groups
    R = Bg * C                                     # rows per group (sublane axis)
    x_rows = x.reshape(num_groups, R, S)           # contiguous reshape: free

    # Layout plumbing outside the kernel: pre-transpose the 1x1x1-conv weights,
    # fold 1/temperature into W2, tile W1^T per batch row, build row->batch selector.
    w1t = jnp.asarray(w1, jnp.float32).T                                    # (C, hidden)
    w1rep = jnp.tile(w1t, (Bg, 1))                                          # (R, hidden)
    w2t = (jnp.asarray(w2, jnp.float32) * (1.0 / float(temperature))).T     # (hidden, K)
    row_batch = jnp.arange(R, dtype=jnp.int32) // C
    sel = (jnp.arange(Bg, dtype=jnp.int32)[:, None] == row_batch[None, :]
           ).astype(jnp.float32)                                            # (Bg, R)

    # Generation-aware tile sizing: per-buffer budget ~ VMEM/4 (double-buffered).
    try:
        vmem_cap = int(pltpu.get_tpu_info().vmem_capacity_bytes)
    except Exception:
        vmem_cap = 64 * 1024 * 1024
    if vmem_cap <= 0:
        vmem_cap = 64 * 1024 * 1024
    target_tile_bytes = vmem_cap // 4

    slab_bytes = _round_up(R, 8) * LANE * itemsize       # one 128-lane slab in VMEM
    total_chunks = pl.cdiv(S, LANE)
    chunks = max(1, min(target_tile_bytes // slab_bytes, total_chunks))
    if chunks >= total_chunks and total_chunks >= 2:
        # Everything would fit in one grid step: split in two so both pipeline
        # buffers are actually used instead of one sitting as dead VMEM.
        chunks = pl.cdiv(total_chunks, 2)
    inner = next(d for d in (8, 4, 2, 1) if chunks % d == 0)
    s_tile = chunks * LANE
    num_tiles = pl.cdiv(S, s_tile)

    tile_bytes = _round_up(R, 8) * s_tile * itemsize
    vmem_limit = min(vmem_cap - 8 * 1024 * 1024,
                     max(32 * 1024 * 1024, 2 * tile_bytes + 16 * 1024 * 1024))

    kernel = functools.partial(
        attention3d_kernel,
        s_total=S,
        s_tile=s_tile,
        n_outer=chunks // inner,
        inner=inner,
        inv_s=1.0 / float(S),
        need_mask=(S % s_tile) != 0,
    )

    out = pl.pallas_call(
        kernel,
        out_shape=jax.ShapeDtypeStruct((num_groups, Bg, K), jnp.float32),
        grid_spec=pltpu.PrefetchScalarGridSpec(
            num_scalar_prefetch=0,
            grid=(num_groups, num_tiles),
            in_specs=[
                pl.BlockSpec((1, R, s_tile), lambda g, s: (g, 0, s)),
                pl.BlockSpec((Bg, R), lambda g, s: (0, 0)),
                pl.BlockSpec((R, hidden), lambda g, s: (0, 0)),
                pl.BlockSpec((hidden, K), lambda g, s: (0, 0)),
            ],
            out_specs=pl.BlockSpec((1, Bg, K), lambda g, s: (g, 0, 0)),
            scratch_shapes=[pltpu.VMEM((R, LANE), jnp.float32)],
        ),
        compiler_params=pltpu.CompilerParams(
            dimension_semantics=("parallel", "arbitrary"),   # S is the reduction axis
            vmem_limit_bytes=int(vmem_limit),
        ),
    )(x_rows, sel, w1rep, w2t)
    return out.reshape(B, K)


def attention3d_reference(x, w1, w2, temperature):
    pooled = jnp.mean(x.reshape(x.shape[0], x.shape[1], -1), axis=-1)
    h = jnp.maximum(pooled @ w1.T, 0.0)
    logits = h @ w2.T
    return jax.nn.softmax(logits / temperature, axis=1)


if __name__ == "__main__":
    # Module config (mirrors attention3d.__init__):
    in_planes = 4
    ratios = 0.25
    K = 4
    temperature = 4                       # satisfies temperature % 3 == 1
    hidden_planes = int(in_planes * ratios) + 1 if in_planes != 3 else K  # = 2

    key = jax.random.PRNGKey(0)
    kx1, kx2, k1, k2 = jax.random.split(key, 4)
    # Deterministic synthetic weights (Conv3d 1x1x1 kernels squeezed to 2D).
    w1 = jax.random.normal(k1, (hidden_planes, in_planes), dtype=jnp.float32) * 0.5
    w2 = jax.random.normal(k2, (K, hidden_planes), dtype=jnp.float32) * 0.5

    # Config 1: ragged spatial extent (S=378) exercises in-kernel tail masking.
    B1, D1, H1, W1 = 2, 6, 7, 9
    x1 = jax.random.normal(kx1, (B1, in_planes, D1, H1, W1), dtype=jnp.float32)
    out1 = jax.block_until_ready(attention3d_forward(x1, w1, w2, temperature))
    ref1 = attention3d_reference(x1, w1, w2, temperature)
    assert out1.shape == (B1, K)
    assert jnp.allclose(out1, ref1, atol=1e-5, rtol=1e-5)

    # Config 2: B*C = 16 exercises the two-group "parallel" (megacore) path.
    B2, D2, H2, W2 = 4, 8, 8, 8
    x2 = jax.random.normal(kx2, (B2, in_planes, D2, H2, W2), dtype=jnp.float32)
    out2 = jax.block_until_ready(attention3d_forward(x2, w1, w2, temperature))
    ref2 = attention3d_reference(x2, w1, w2, temperature)
    assert out2.shape == (B2, K)
    assert jnp.allclose(out2, ref2, atol=1e-5, rtol=1e-5)

    print("KERNEL_OK")
</pallas_src>

<mosaic_0001>
module attributes {stable_mosaic.version = 11 : i64} {
  func.func @attention3d_kernel(%arg0: i32, %arg1: i32, %arg2: memref<1x8x256xf32, #tpu.memory_space<vmem>>, %arg3: memref<2x8xf32, #tpu.memory_space<vmem>>, %arg4: memref<8x2xf32, #tpu.memory_space<vmem>>, %arg5: memref<2x4xf32, #tpu.memory_space<vmem>>, %arg6: memref<1x2x4xf32, #tpu.memory_space<vmem>>, %arg7: memref<8x128xf32, #tpu.memory_space<vmem>>) attributes {dimension_semantics = [#tpu.dimension_semantics<parallel>, #tpu.dimension_semantics<arbitrary>], iteration_bounds = array<i64: 1, 2>, scalar_prefetch = 0 : i64, scratch_operands = 1 : i64, tpu.core_type = #tpu.core_type<tc>, window_params = [{transform_indices = @transform_0, window_bounds = array<i64: 1, 8, 256>}, {pipeline_mode = #tpu.pipeline_mode<synchronous>, transform_indices = @transform_1, window_bounds = array<i64: 2, 8>}, {pipeline_mode = #tpu.pipeline_mode<synchronous>, transform_indices = @transform_2, window_bounds = array<i64: 8, 2>}, {pipeline_mode = #tpu.pipeline_mode<synchronous>, transform_indices = @transform_3, window_bounds = array<i64: 2, 4>}, {transform_indices = @transform_4, window_bounds = array<i64: 1, 2, 4>}]} {
    %c0_i32 = arith.constant 0 : i32
    %0 = arith.cmpi eq, %arg1, %c0_i32 : i32
    %1 = arith.extui %0 : i1 to i32
    %c0_i32_0 = arith.constant 0 : i32
    %2 = arith.cmpi ne, %1, %c0_i32_0 : i32
    scf.if %2 {
      %cst_17 = arith.constant 0.000000e+00 : f32
      %37 = vector.broadcast %cst_17 : f32 to vector<8x128xf32>
      %c0_18 = arith.constant 0 : index
      %c0_19 = arith.constant 0 : index
      %38 = vector.load %arg7[%c0_18, %c0_19] : memref<8x128xf32, #tpu.memory_space<vmem>>, vector<8x128xf32>
      tpu.vector_store %arg7[%c0_18, %c0_19], %37 {strides = array<i32>} : memref<8x128xf32, #tpu.memory_space<vmem>>, vector<8x128xf32>,
    } else {
    }
    %3 = tpu.iota {dimensions = array<i32: 1>} : vector<8x128xi32>
    %c256_i32 = arith.constant 256 : i32
    %4 = arith.muli %arg1, %c256_i32 : i32
    %c378_i32 = arith.constant 378 : i32
    %5 = arith.subi %c378_i32, %4 : i32
    %c0_i32_1 = arith.constant 0 : i32
    %c1_i32 = arith.constant 1 : i32
    %6 = arith.muli %c0_i32_1, %c1_i32 : i32
    %c0_i32_2 = arith.constant 0 : i32
    %7 = arith.addi %c0_i32_2, %6 : i32
    %c256_i32_3 = arith.constant 256 : i32
    %8 = arith.muli %7, %c256_i32_3 : i32
    %9 = tpu.assume_multiple %8, 128 : i32
    %cst = arith.constant 0.000000e+00 : f32
    %10 = vector.broadcast %cst : f32 to vector<8x128xf32>
    %c0_i32_4 = arith.constant 0 : i32
    %11 = arith.addi %9, %c0_i32_4 : i32
    %c0 = arith.constant 0 : index
    %c0_5 = arith.constant 0 : index
    %12 = arith.index_cast %11 : i32 to index
    %13 = vector.load %arg2[%c0, %c0_5, %12] : memref<1x8x256xf32, #tpu.memory_space<vmem>>, vector<1x8x128xf32>
    %14 = vector.shape_cast %13 : vector<1x8x128xf32> to vector<8x128xf32>
    %15 = arith.subi %5, %11 : i32
    %16 = vector.broadcast %15 : i32 to vector<8x128xi32>
    %17 = arith.cmpi slt, %3, %16 : vector<8x128xi32>
    %cst_6 = arith.constant 0.000000e+00 : f32
    %18 = vector.broadcast %cst_6 : f32 to vector<8x128xf32>
    %19 = arith.select %17, %14, %18 : vector<8x128xi1>, vector<8x128xf32>
    %20 = arith.addf %10, %19 : vector<8x128xf32>
    %c128_i32 = arith.constant 128 : i32
    %21 = arith.addi %9, %c128_i32 : i32
    %c0_7 = arith.constant 0 : index
    %c0_8 = arith.constant 0 : index
    %22 = arith.index_cast %21 : i32 to index
    %23 = vector.load %arg2[%c0_7, %c0_8, %22] : memref<1x8x256xf32, #tpu.memory_space<vmem>>, vector<1x8x128xf32>
    %24 = vector.shape_cast %23 : vector<1x8x128xf32> to vector<8x128xf32>
    %25 = arith.subi %5, %21 : i32
    %26 = vector.broadcast %25 : i32 to vector<8x128xi32>
    %27 = arith.cmpi slt, %3, %26 : vector<8x128xi32>
    %cst_9 = arith.constant 0.000000e+00 : f32
    %28 = vector.broadcast %cst_9 : f32 to vector<8x128xf32>
    %29 = arith.select %27, %24, %28 : vector<8x128xi1>, vector<8x128xf32>
    %30 = arith.addf %20, %29 : vector<8x128xf32>
    %c0_10 = arith.constant 0 : index
    %c0_11 = arith.constant 0 : index
    %31 = vector.load %arg7[%c0_10, %c0_11] : memref<8x128xf32, #tpu.memory_space<vmem>>, vector<8x128xf32>
    %32 = arith.addf %31, %30 : vector<8x128xf32>
    %c0_12 = arith.constant 0 : index
    %c0_13 = arith.constant 0 : index
    %33 = vector.load %arg7[%c0_12, %c0_13] : memref<8x128xf32, #tpu.memory_space<vmem>>, vector<8x128xf32>
    tpu.vector_store %arg7[%c0_12, %c0_13], %32 {strides = array<i32>} : memref<8x128xf32, #tpu.memory_space<vmem>>, vector<8x128xf32>,
    %c1_i32_14 = arith.constant 1 : i32
    %c1_i32_15 = arith.constant 1 : i32
    %34 = arith.cmpi eq, %arg1, %c1_i32_15 : i32
    %35 = arith.extui %34 : i1 to i32
    %c0_i32_16 = arith.constant 0 : i32
    %36 = arith.cmpi ne, %35, %c0_i32_16 : i32
    scf.if %36 {
      %c0_17 = arith.constant 0 : index
      %c0_18 = arith.constant 0 : index
      %37 = vector.load %arg7[%c0_17, %c0_18] : memref<8x128xf32, #tpu.memory_space<vmem>>, vector<8x128xf32>
      %cst_19 = arith.constant dense<0.000000e+00> : vector<8xf32>
      %38 = vector.multi_reduction <add>, %37, %cst_19 [1] : vector<8x128xf32> to vector<8xf32>
      %39 = vector.shape_cast %38 : vector<8xf32> to vector<8x1xf32>
      %cst_20 = arith.constant 0.00264550257 : f32
      %40 = vector.broadcast %cst_20 : f32 to vector<8x1xf32>
      %41 = arith.mulf %39, %40 : vector<8x1xf32>
      %c0_21 = arith.constant 0 : index
      %c0_22 = arith.constant 0 : index
      %42 = vector.load %arg3[%c0_21, %c0_22] : memref<2x8xf32, #tpu.memory_space<vmem>>, vector<2x8xf32>
      %c0_23 = arith.constant 0 : index
      %c0_24 = arith.constant 0 : index
      %43 = vector.load %arg4[%c0_23, %c0_24] : memref<8x2xf32, #tpu.memory_space<vmem>>, vector<8x2xf32>
      %44 = vector.broadcast %41 : vector<8x1xf32> to vector<8x2xf32>
      %45 = arith.mulf %44, %43 : vector<8x2xf32>
      %cst_25 = arith.constant dense<0.000000e+00> : vector<2x2xf32>
      %46 = tpu.matmul %42, %45, %cst_25 {dimension_numbers = #tpu.dot_dimension_numbers<[1], [0], [0], [1], [0, 0, 1, 1], [], []>} : vector<2x8xf32>, vector<8x2xf32>, vector<2x2xf32> -> vector<2x2xf32>
      %cst_26 = arith.constant 0.000000e+00 : f32
      %47 = vector.broadcast %cst_26 : f32 to vector<2x2xf32>
      %48 = arith.maximumf %46, %47 : vector<2x2xf32>
      %c0_27 = arith.constant 0 : index
      %c0_28 = arith.constant 0 : index
      %49 = vector.load %arg5[%c0_27, %c0_28] : memref<2x4xf32, #tpu.memory_space<vmem>>, vector<2x4xf32>
      %cst_29 = arith.constant dense<0.000000e+00> : vector<2x4xf32>
      %50 = tpu.matmul %48, %49, %cst_29 {dimension_numbers = #tpu.dot_dimension_numbers<[1], [0], [0], [1], [0, 0, 1, 1], [], []>} : vector<2x2xf32>, vector<2x4xf32>, vector<2x4xf32> -> vector<2x4xf32>
      %cst_30 = arith.constant dense<0xFF800000> : vector<2xf32>
      %51 = vector.multi_reduction <maximumf>, %50, %cst_30 [1] : vector<2x4xf32> to vector<2xf32>
      %52 = vector.shape_cast %51 : vector<2xf32> to vector<2x1xf32>
      %53 = vector.broadcast %52 : vector<2x1xf32> to vector<2x4xf32>
      %54 = arith.subf %50, %53 : vector<2x4xf32>
      %55 = math.exp %54 : vector<2x4xf32>
      %cst_31 = arith.constant dense<0.000000e+00> : vector<2xf32>
      %56 = vector.multi_reduction <add>, %55, %cst_31 [1] : vector<2x4xf32> to vector<2xf32>
      %57 = vector.shape_cast %56 : vector<2xf32> to vector<2x1xf32>
      %58 = vector.broadcast %57 : vector<2x1xf32> to vector<2x4xf32>
      %59 = arith.divf %55, %58 : vector<2x4xf32>
      %c0_32 = arith.constant 0 : index
      %c0_33 = arith.constant 0 : index
      %c0_34 = arith.constant 0 : index
      %60 = vector.load %arg6[%c0_32, %c0_33, %c0_34] : memref<1x2x4xf32, #tpu.memory_space<vmem>>, vector<1x2x4xf32>
      %61 = vector.shape_cast %60 : vector<1x2x4xf32> to vector<2x4xf32>
      %62 = vector.shape_cast %59 : vector<2x4xf32> to vector<1x2x4xf32>
      tpu.vector_store %arg6[%c0_32, %c0_33, %c0_34], %62 {strides = array<i32>} : memref<1x2x4xf32, #tpu.memory_space<vmem>>, vector<1x2x4xf32>,
    } else {
    }
    return
  }
  func.func @transform_0(%arg0: i32, %arg1: i32) -> (i32, i32, i32) {
    %c0_i32 = arith.constant 0 : i32
    %c0_i32_0 = arith.constant 0 : i32
    return %arg0, %c0_i32, %arg1 : i32, i32, i32
  }
  func.func @transform_1(%arg0: i32, %arg1: i32) -> (i32, i32) {
    %c0_i32 = arith.constant 0 : i32
    %c0_i32_0 = arith.constant 0 : i32
    %c0_i32_1 = arith.constant 0 : i32
    return %c0_i32, %c0_i32_0 : i32, i32
  }
  func.func @transform_2(%arg0: i32, %arg1: i32) -> (i32, i32) {
    %c0_i32 = arith.constant 0 : i32
    %c0_i32_0 = arith.constant 0 : i32
    %c0_i32_1 = arith.constant 0 : i32
    return %c0_i32, %c0_i32_0 : i32, i32
  }
  func.func @transform_3(%arg0: i32, %arg1: i32) -> (i32, i32) {
    %c0_i32 = arith.constant 0 : i32
    %c0_i32_0 = arith.constant 0 : i32
    %c0_i32_1 = arith.constant 0 : i32
    return %c0_i32, %c0_i32_0 : i32, i32
  }
  func.func @transform_4(%arg0: i32, %arg1: i32) -> (i32, i32, i32) {
    %c0_i32 = arith.constant 0 : i32
    %c0_i32_0 = arith.constant 0 : i32
    %c0_i32_1 = arith.constant 0 : i32
    return %arg0, %c0_i32, %c0_i32_0 : i32, i32, i32
  }
}

</mosaic_0001>

<llo_original>
// kernel: tpu_custom_call.1
$region0: #{tpu_custom_call.1}
  #allocation0 [shape = 'u32[]', space=smem, size = 0x4, offset = 0x4, fixed_abs, tag = 'smem constant byte address 0x4 - core index']
  #allocation1 [shape = 'u32[144,128]{1,0:T(1,128)}', space=vmem, size = 0x12000, scoped, tag = 'internal scratch']
  #allocation2 [shape = 'f32[8,128]{1,0:T(8,128)}', space=vmem, size = 0x1000, scoped, tag = 'scratch operand']
  %s0 = inlined_call_operand.hbm [shape: f32[1,8,378], index: 0, kind: input, shape index: {}]
  %s1 = inlined_call_operand.vmem [shape: f32[2,8], index: 1, kind: input, shape index: {}]
  %s2 = inlined_call_operand.vmem [shape: f32[8,2], index: 2, kind: input, shape index: {}]
  %s3 = inlined_call_operand.vmem [shape: f32[2,4], index: 3, kind: input, shape index: {}]
  %s4 = inlined_call_operand.hbm [shape: f32[1,2,4], index: 4, kind: output, shape index: {}]
  %s5 = sld [smem:[#allocation0]]
  $region61: #{tpu_custom_call.1} parent=0
    _
  %s7 = ssub.s32 1, %s5
  %s8 = scalar_select 0, %s7, %s5
  $region1: #{tpu_custom_call.1} parent=0
    #allocation3 [shape = 'u8[16384]{0}', space=vmem, size = 0x4000, scoped, tag = 'input window, operand 0']
    #allocation4 [shape = 's32[2]{0}', space=sflag, size = 0x8, scoped, tag = 'scoped memory for tpu_custom_call.1']
    #allocation5 [shape = 's32[2]{0}', space=sflag, size = 0x8, scoped, tag = 'scoped memory for tpu_custom_call.1']
    #allocation6 [shape = 'u8[1024]{0}', space=vmem, size = 0x400, scoped, tag = 'output window, operand 0, single buffered']
    %9 = vsyncpa [#allocation4], 0
    %s10 = scalar_lea.sflag [#allocation4], 1
    %11 = vsyncpa %s10, 0
    %12 = vsyncpa [#allocation5], 0
    loop: start=0, step=1, limit=4
    $region2: #{tpu_custom_call.1} parent=1 // loop_pre_header
      _
    $region3: #{tpu_custom_call.1} parent=1 // loop_header
      %s14 = sphi 0, %s18
      %p15 = scmp.ge.s32.totalorder %s14, 4
      %s21 = sphi 0, %s33
      %s22 = sphi 0, %s29
      %s23 = sphi 0, %s21
      %s24 = sphi 0, %s22
      %s25 = sphi 0, %s23
      %s26 = sphi 0, %s24
      %s38 = sphi 0, %s40
      %s41 = sphi 0, %s38
      %s42 = sphi 0, %s41
      %s58 = sphi 0, %s42
      %s62 = sphi 0, %s62
      %s64 = sphi 0, %s62
      %s65 = sphi 0, %s64
      %s79 = sphi 0, %s65
      %s83 = sphi 0, %s83
      %s85 = sphi 0, %s83
      %s86 = sphi 0, %s85
      %s100 = sphi 0, %s86
      %s104 = sphi 0, %s104
      %s106 = sphi 0, %s104
      %s107 = sphi 0, %s106
      %s121 = sphi 0, %s107
      %s127 = sphi 0, %s129
      %s130 = sphi 0, %s127
      %s131 = sphi 0, %s130
      %s147 = sphi 0, %s131
    $region4: #{tpu_custom_call.1} parent=1 // loop_header_branch
      %17 = sbr.rel (%p15) target = $region8
    $region5: #{tpu_custom_call.1} parent=1 // loop_body
      %s19 = ssub.s32 %s14, 1
      %s20 = ssub.s32 %s14, 2
      %s27 = sadd.s32 1, %s22
      %p28 = scmp.ge.s32.totalorder %s27, 2
      %s29 = scalar_select %p28, 0, %s27
      %s30 = sadd.s32 1, %s21
      %s31 = scalar_select %p28, %s30, %s21
      %p32 = scmp.ge.s32.totalorder %s31, 1
      %s33 = scalar_select %p32, 0, %s31
      %s34 = ssub.s32 %s21, %s33
      %s35 = ssub.s32 %s22, %s29
      %s36 = sor.u32 %s34, %s35
      %p37 = scmp.eq.s32.totalorder %s36, 0
      %s39 = sadd.s32 %s38, 1
      %s40 = scalar_select %p37, %s38, %s39
      %p43 = pneg %p37
      %p44 = scmp.eq.s32.totalorder %s14, 1
      %p45 = por %p43, %p44
      %p46 = scmp.ne.s32.totalorder %s38, %s41
      %p47 = scmp.eq.s32.totalorder %s14, 0
      %p48 = por %p46, %p47
      %p49 = scmp.ne.s32.totalorder %s38, %s41
      %p50 = scmp.eq.s32.totalorder %s19, 1
      %p51 = por %p49, %p50
      %p52 = scmp.ne.s32.totalorder %s41, %s42
      %p53 = scmp.eq.s32.totalorder %s19, 0
      %p54 = por %p52, %p53
      %p55 = scmp.ne.s32.totalorder %s41, %s42
      %p56 = scmp.eq.s32.totalorder %s20, 1
      %p57 = por %p55, %p56
      %p59 = scmp.ne.s32.totalorder %s42, %s58
      %p60 = scmp.eq.s32.totalorder %s20, 0
      %p61 = por %p59, %p60
      %s63 = sadd.s32 %s62, 1
      %p66 = scmp.eq.s32.totalorder %s14, 1
      %p67 = scmp.ne.s32.totalorder %s62, %s64
      %p68 = scmp.eq.s32.totalorder %s14, 0
      %p69 = por %p67, %p68
      %p70 = scmp.ne.s32.totalorder %s62, %s64
      %p71 = scmp.eq.s32.totalorder %s19, 1
      %p72 = por %p70, %p71
      %p73 = scmp.ne.s32.totalorder %s64, %s65
      %p74 = scmp.eq.s32.totalorder %s19, 0
      %p75 = por %p73, %p74
      %p76 = scmp.ne.s32.totalorder %s64, %s65
      %p77 = scmp.eq.s32.totalorder %s20, 1
      %p78 = por %p76, %p77
      %p80 = scmp.ne.s32.totalorder %s65, %s79
      %p81 = scmp.eq.s32.totalorder %s20, 0
      %p82 = por %p80, %p81
      %s84 = sadd.s32 %s83, 1
      %p87 = scmp.eq.s32.totalorder %s14, 1
      %p88 = scmp.ne.s32.totalorder %s83, %s85
      %p89 = scmp.eq.s32.totalorder %s14, 0
      %p90 = por %p88, %p89
      %p91 = scmp.ne.s32.totalorder %s83, %s85
      %p92 = scmp.eq.s32.totalorder %s19, 1
      %p93 = por %p91, %p92
      %p94 = scmp.ne.s32.totalorder %s85, %s86
      %p95 = scmp.eq.s32.totalorder %s19, 0
      %p96 = por %p94, %p95
      %p97 = scmp.ne.s32.totalorder %s85, %s86
      %p98 = scmp.eq.s32.totalorder %s20, 1
      %p99 = por %p97, %p98
      %p101 = scmp.ne.s32.totalorder %s86, %s100
      %p102 = scmp.eq.s32.totalorder %s20, 0
      %p103 = por %p101, %p102
      %s105 = sadd.s32 %s104, 1
      %p108 = scmp.eq.s32.totalorder %s14, 1
      %p109 = scmp.ne.s32.totalorder %s104, %s106
      %p110 = scmp.eq.s32.totalorder %s14, 0
      %p111 = por %p109, %p110
      %p112 = scmp.ne.s32.totalorder %s104, %s106
      %p113 = scmp.eq.s32.totalorder %s19, 1
      %p114 = por %p112, %p113
      %p115 = scmp.ne.s32.totalorder %s106, %s107
      %p116 = scmp.eq.s32.totalorder %s19, 0
      %p117 = por %p115, %p116
      %p118 = scmp.ne.s32.totalorder %s106, %s107
      %p119 = scmp.eq.s32.totalorder %s20, 1
      %p120 = por %p118, %p119
      %p122 = scmp.ne.s32.totalorder %s107, %s121
      %p123 = scmp.eq.s32.totalorder %s20, 0
      %p124 = por %p122, %p123
      %s125 = ssub.s32 %s21, %s33
      %p126 = scmp.eq.s32.totalorder %s125, 0
      %s128 = sadd.s32 %s127, 1
      %s129 = scalar_select %p126, %s127, %s128
      %p132 = pneg %p126
      %p133 = scmp.eq.s32.totalorder %s14, 1
      %p134 = por %p132, %p133
      %p135 = scmp.ne.s32.totalorder %s127, %s130
      %p136 = scmp.eq.s32.totalorder %s14, 0
      %p137 = por %p135, %p136
      %p138 = scmp.ne.s32.totalorder %s127, %s130
      %p139 = scmp.eq.s32.totalorder %s19, 1
      %p140 = por %p138, %p139
      %p141 = scmp.ne.s32.totalorder %s130, %s131
      %p142 = scmp.eq.s32.totalorder %s19, 0
      %p143 = por %p141, %p142
      %p144 = scmp.ne.s32.totalorder %s130, %s131
      %p145 = scmp.eq.s32.totalorder %s20, 1
      %p146 = por %p144, %p145
      %p148 = scmp.ne.s32.totalorder %s131, %s147
      %p149 = scmp.eq.s32.totalorder %s20, 0
      %p150 = por %p148, %p149
      %p151 = scmp.le.s32.totalorder 1, %s14
      %p152 = scmp.lt.s32.totalorder %s14, 3
      %p153 = pnand %p151, %p152
      %p154 = pneg %p153
      // Predicated region
      $region9: #{tpu_custom_call.1} parent=5 // pred_check
        _
      $region10: #{tpu_custom_call.1} parent=5 // pred_check_branch
        %156 = sbr.rel (%p153) target = $region12
      $region11: #{tpu_custom_call.1} parent=5 // pred_region
        %s157 = ssub.s32 %s14, 1
        // Predicated region
        $region13: #{tpu_custom_call.1} parent=11 // pred_check
          %p158 = pneg %p75
        $region14: #{tpu_custom_call.1} parent=11 // pred_check_branch
          %160 = sbr.rel (%p158) target = $region16
        $region15: #{tpu_custom_call.1} parent=11 // pred_region
          _
        $region16: #{tpu_custom_call.1} parent=11 // pred_fallthru
          _
        // Predicated region
        $region17: #{tpu_custom_call.1} parent=11 // pred_check
          %p161 = pneg %p96
        $region18: #{tpu_custom_call.1} parent=11 // pred_check_branch
          %163 = sbr.rel (%p161) target = $region20
        $region19: #{tpu_custom_call.1} parent=11 // pred_region
          _
        $region20: #{tpu_custom_call.1} parent=11 // pred_fallthru
          _
        // Predicated region
        $region21: #{tpu_custom_call.1} parent=11 // pred_check
          %p164 = pneg %p117
        $region22: #{tpu_custom_call.1} parent=11 // pred_check_branch
          %166 = sbr.rel (%p164) target = $region24
        $region23: #{tpu_custom_call.1} parent=11 // pred_region
          _
        $region24: #{tpu_custom_call.1} parent=11 // pred_fallthru
          _
      $region12: #{tpu_custom_call.1} parent=5 // pred_fallthru
        _
      %p167 = scmp.lt.s32.totalorder %s14, 2
      // Predicated region
      $region25: #{tpu_custom_call.1} parent=5 // pred_check
        %p168 = pneg %p167
      $region26: #{tpu_custom_call.1} parent=5 // pred_check_branch
        %170 = sbr.rel (%p168) target = $region28
      $region27: #{tpu_custom_call.1} parent=5 // pred_region
        // Predicated region
        $region29: #{tpu_custom_call.1} parent=27 // pred_check
          %p171 = pneg %p48
        $region30: #{tpu_custom_call.1} parent=27 // pred_check_branch
          %173 = sbr.rel (%p171) target = $region32
        $region31: #{tpu_custom_call.1} parent=27 // pred_region
          %s174 = sand.u32 %s38, 1
          %s175 = scalar_lea.sflag [#allocation4], %s174
          %s176 = sand.u32 %s38, 1
          %s177 = smul.addr %s176, 16
          %s178 = scalar_lea.vmem [#allocation3], %s177
          %s179 = smul.u32 2, %s22
          %s180 = ssub.s32 3, %s179
          %p181 = scmp.lt.s32.totalorder %s180, 2
          %s182 = scalar_select %p181, %s180, 2
          %s183 = smul.u32 128, %s182
          %s185 = ssub.s32 256, %s183
          %186 = vsyncadd %s175, %s185
          %p187 = scmp.ne.s32.totalorder 0, %s183
          %s188 = smul.addr %s21, 3
          %s189 = sadd.s32 %s179, %s188
          %s190 = smul.addr %s189, 128
          %s191 = scalar_lea.hbm %s0, %s190
          %s192 = smul.u32 %s182, 8
          %s193 = sshll.u32 %s192, 4
          %s194 = sshll.u32 %s178, 4
          %s195 = int_to_ptr.vmem [resolvable:$true] %s194
          %197 = dma.hbm_to_vmem [thread:$0]  (%p187), %s191, %s193, %s195, %s175
        $region32: #{tpu_custom_call.1} parent=27 // pred_fallthru
          _
      $region28: #{tpu_custom_call.1} parent=5 // pred_fallthru
        _
      %p198 = scmp.le.s32.totalorder 1, %s14
      %p199 = scmp.lt.s32.totalorder %s14, 3
      %p200 = pnand %p198, %p199
      %p201 = pneg %p200
      // Predicated region
      $region33: #{tpu_custom_call.1} parent=5 // pred_check
        _
      $region34: #{tpu_custom_call.1} parent=5 // pred_check_branch
        %203 = sbr.rel (%p200) target = $region36
      $region35: #{tpu_custom_call.1} parent=5 // pred_region
        %s204 = ssub.s32 %s14, 1
        %s205 = sand.u32 %s41, 1
        %s206 = scalar_lea.sflag [#allocation4], %s205
        %s207 = sand.u32 %s41, 1
        %s208 = smul.addr %s207, 16
        %s209 = scalar_lea.vmem [#allocation3], %s208
        // Predicated region
        $region37: #{tpu_custom_call.1} parent=35 // pred_check
          %p210 = pneg %p54
        $region38: #{tpu_custom_call.1} parent=35 // pred_check_branch
          %212 = sbr.rel (%p210) target = $region40
        $region39: #{tpu_custom_call.1} parent=35 // pred_region
          %213 = dma.done %s206, 256
        $region40: #{tpu_custom_call.1} parent=35 // pred_fallthru
          _
        %s214 = sand.u32 %s41, 1
        %s215 = scalar_lea.sflag [#allocation4], %s214
        %s216 = sand.u32 %s41, 1
        %s217 = smul.addr %s216, 16
        %s218 = scalar_lea.vmem [#allocation3], %s217
        %p219 = pneg %p54
        %p220 = pneg %p51
        %p221 = pneg %p75
        %p222 = pneg %p72
        %p223 = pneg %p96
        %p224 = pneg %p93
        %p225 = pneg %p117
        %p226 = pneg %p114
        %p227 = pneg %p143
        %p228 = pneg %p140
        %s229 = smul.u32 2, %s24
        %s230 = ssub.s32 3, %s229
        %p231 = scmp.lt.s32.totalorder %s230, 2
        %s232 = scalar_select %p231, %s230, 2
        %s233 = smul.u32 128, %s232
        %p234 = scmp.eq.s32.totalorder %s24, 0
        // Predicated region
        $region41: #{tpu_custom_call.1} parent=35 // pred_check
          %p235 = pneg %p234
        $region42: #{tpu_custom_call.1} parent=35 // pred_check_branch
          %237 = sbr.rel (%p235) target = $region44
        $region43: #{tpu_custom_call.1} parent=35 // pred_region
          %238 = vst [vmem:[#allocation2] sm:$0xff] 0.0
        $region44: #{tpu_custom_call.1} parent=35 // pred_fallthru
          _
        %v239 = vlaneseq
        %v240 = vand.u32 %v239, 127
        %s241 = smul.u32 %s24, 256
        %s242 = ssub.s32 378, %s241
        %v243 = vld [vmem:[%s209] sm:$0xff]
        %s244 = ssub.s32 %s242, 0
        %v245 = vstv %s244
        %vm246 = vcmp.lt.s32.totalorder %v240, %v245
        %v247 = vsel %vm246, %v243, 0.0
        %v248 = vadd.f32 %v247, 0.0
        %s249 = sadd.s32 0, 128
        %s250 = sshra.s32 %s249, 7
        %s251 = sand.u32 %s249, 127
        %s252 = smul.addr %s250, 8
        %s253 = scalar_lea.vmem %s209, %s252 [#allocation3]
        %v254 = vld [vmem:[%s253] sm:$0xff]
        %s255 = ssub.s32 %s242, %s249
        %v256 = vstv %s255
        %vm257 = vcmp.lt.s32.totalorder %v240, %v256
        %v258 = vsel %vm257, %v254, 0.0
        %v259 = vadd.f32 %v248, %v258
        %v260 = vld [vmem:[#allocation2] sm:$0xff]
        %v261 = vadd.f32 %v260, %v259
        %262 = vst [vmem:[#allocation2] sm:$0xff] %v261
        %p263 = scmp.eq.s32.totalorder %s24, 1
        // Predicated region
        $region45: #{tpu_custom_call.1} parent=35 // pred_check
          %p264 = pneg %p263
        $region46: #{tpu_custom_call.1} parent=35 // pred_check_branch
          %266 = sbr.rel (%p264) target = $region48
        $region47: #{tpu_custom_call.1} parent=35 // pred_region
          %v267 = vld [vmem:[#allocation2] sm:$0xff]
          %268 = vadd.xlane.f32.xlu0 %v267
          %v269 = vpop.xlane.xlu0 %268
          %v270 = vmul.f32 %v269, 0.0026455026
          %v271 = vld [vmem:[%s1] sm:$0x3]
          %v272 = vld [vmem:[%s2] sm:$0xff]
          %v273 = vmul.f32 %v270, %v272
          %vm274 = vcmask 64512
          %v276 = vsel %vm274, %v271, 0
          %278 = vmatprep.subr.mxu0 0.0
          %279 = vmatpush1.msra.mxu0 %v273
          %280 = vmatprep.subr.mxu0 0.0
          %281 = vmatpush1.msra.mxu0 0.0
          %282 = vmatprep.subr.mxu0 0.0
          %283 = vmatpush1.msra.mxu0 0.0
          %284 = vmatprep.subr.mxu0 0.0
          %285 = vmatpush1.msra.mxu0 0.0
          %286 = vmatprep.subr.mxu0 0.0
          %287 = vmatpush1.msra.mxu0 0.0
          %288 = vmatprep.subr.mxu0 0.0
          %289 = vmatpush1.msra.mxu0 0.0
          %290 = vmatprep.subr.mxu0 0.0
          %291 = vmatpush1.msra.mxu0 0.0
          %292 = vmatprep.subr.mxu0 0.0
          %293 = vmatpush1.msra.mxu0 0.0
          %294 = vmatprep.subr.mxu0 0.0
          %295 = vmatpush1.msra.mxu0 0.0
          %296 = vmatprep.subr.mxu0 0.0
          %297 = vmatpush1.msra.mxu0 0.0
          %298 = vmatprep.subr.mxu0 0.0
          %299 = vmatpush1.msra.mxu0 0.0
          %300 = vmatprep.subr.mxu0 0.0
          %301 = vmatpush1.msra.mxu0 0.0
          %302 = vmatprep.subr.mxu0 0.0
          %303 = vmatpush1.msra.mxu0 0.0
          %304 = vmatprep.subr.mxu0 0.0
          %305 = vmatpush1.msra.mxu0 0.0
          %306 = vmatprep.subr.mxu0 0.0
          %307 = vmatpush1.msra.mxu0 0.0
          %308 = vmatprep.subr.mxu0 0.0
          %309 = vmatpush1.msra.mxu0 0.0
          %310 = vmatprep.subr.mxu0 0.0
          %311 = vmatpush1.msra.mxu0 0.0
          %312 = vmatprep.subr.mxu0 0.0
          %313 = vmatpush1.msra.mxu0 0.0
          %314 = vmatprep.subr.mxu0 0.0
          %315 = vmatpush1.msra.mxu0 0.0
          %316 = vmatprep.subr.mxu0 0.0
          %317 = vmatpush1.msra.mxu0 0.0
          %318 = vmatprep.subr.mxu0 0.0
          %319 = vmatpush1.msra.mxu0 0.0
          %320 = vmatprep.subr.mxu0 0.0
          %321 = vmatpush1.msra.mxu0 0.0
          %322 = vmatprep.subr.mxu0 0.0
          %323 = vmatpush1.msra.mxu0 0.0
          %324 = vmatprep.subr.mxu0 0.0
          %325 = vmatpush1.msra.mxu0 0.0
          %326 = vmatprep.subr.mxu0 0.0
          %327 = vmatpush1.msra.mxu0 0.0
          %328 = vmatprep.subr.mxu0 0.0
          %329 = vmatpush1.msra.mxu0 0.0
          %330 = vmatprep.subr.mxu0 0.0
          %331 = vmatpush1.msra.mxu0 0.0
          %332 = vmatprep.subr.mxu0 0.0
          %333 = vmatpush1.msra.mxu0 0.0
          %334 = vmatprep.subr.mxu0 0.0
          %335 = vmatpush1.msra.mxu0 0.0
          %336 = vmatprep.subr.mxu0 0.0
          %337 = vmatpush1.msra.mxu0 0.0
          %338 = vmatprep.subr.mxu0 0.0
          %339 = vmatpush1.msra.mxu0 0.0
          %340 = vmatprep.subr.mxu0 0.0
          %341 = vmatpush1.msra.mxu0 0.0
          %342 = vmatprep.mubr.f32.mxu0 0.0
          %343 = vmatmul.mubr.f32.gmra.mrb[0].mxu0 %v276
          %v344 = vpop.f32.mrb[0].mxu0
          %v345 = vadd.f32 0.0, %v344
          %v346 = vpop.f32.mrb[0].mxu0
          %347 = vdwg.mxu0
          %v348 = vmax.f32 %v345, 0.0
          %v349 = vld [vmem:[%s3] sm:$0x3]
          %vm350 = vcmask 15360
          %v352 = vsel %vm350, %v348, 0
          %vm354 = vcmask 1041408
          %v356 = vsel %vm354, %v349, 0
          %358 = vmatprep.subr.mxu0 0.0
          %359 = vmatpush1.msra.mxu0 %v356
          %360 = vmatprep.subr.mxu0 0.0
          %361 = vmatpush1.msra.mxu0 0.0
          %362 = vmatprep.subr.mxu0 0.0
          %363 = vmatpush1.msra.mxu0 0.0
          %364 = vmatprep.subr.mxu0 0.0
          %365 = vmatpush1.msra.mxu0 0.0
          %366 = vmatprep.subr.mxu0 0.0
          %367 = vmatpush1.msra.mxu0 0.0
          %368 = vmatprep.subr.mxu0 0.0
          %369 = vmatpush1.msra.mxu0 0.0
          %370 = vmatprep.subr.mxu0 0.0
          %371 = vmatpush1.msra.mxu0 0.0
          %372 = vmatprep.subr.mxu0 0.0
          %373 = vmatpush1.msra.mxu0 0.0
          %374 = vmatprep.subr.mxu0 0.0
          %375 = vmatpush1.msra.mxu0 0.0
          %376 = vmatprep.subr.mxu0 0.0
          %377 = vmatpush1.msra.mxu0 0.0
          %378 = vmatprep.subr.mxu0 0.0
          %379 = vmatpush1.msra.mxu0 0.0
          %380 = vmatprep.subr.mxu0 0.0
          %381 = vmatpush1.msra.mxu0 0.0
          %382 = vmatprep.subr.mxu0 0.0
          %383 = vmatpush1.msra.mxu0 0.0
          %384 = vmatprep.subr.mxu0 0.0
          %385 = vmatpush1.msra.mxu0 0.0
          %386 = vmatprep.subr.mxu0 0.0
          %387 = vmatpush1.msra.mxu0 0.0
          %388 = vmatprep.subr.mxu0 0.0
          %389 = vmatpush1.msra.mxu0 0.0
          %390 = vmatprep.subr.mxu0 0.0
          %391 = vmatpush1.msra.mxu0 0.0
          %392 = vmatprep.subr.mxu0 0.0
          %393 = vmatpush1.msra.mxu0 0.0
          %394 = vmatprep.subr.mxu0 0.0
          %395 = vmatpush1.msra.mxu0 0.0
          %396 = vmatprep.subr.mxu0 0.0
          %397 = vmatpush1.msra.mxu0 0.0
          %398 = vmatprep.subr.mxu0 0.0
          %399 = vmatpush1.msra.mxu0 0.0
          %400 = vmatprep.subr.mxu0 0.0
          %401 = vmatpush1.msra.mxu0 0.0
          %402 = vmatprep.subr.mxu0 0.0
          %403 = vmatpush1.msra.mxu0 0.0
          %404 = vmatprep.subr.mxu0 0.0
          %405 = vmatpush1.msra.mxu0 0.0
          %406 = vmatprep.subr.mxu0 0.0
          %407 = vmatpush1.msra.mxu0 0.0
          %408 = vmatprep.subr.mxu0 0.0
          %409 = vmatpush1.msra.mxu0 0.0
          %410 = vmatprep.subr.mxu0 0.0
          %411 = vmatpush1.msra.mxu0 0.0
          %412 = vmatprep.subr.mxu0 0.0
          %413 = vmatpush1.msra.mxu0 0.0
          %414 = vmatprep.subr.mxu0 0.0
          %415 = vmatpush1.msra.mxu0 0.0
          %416 = vmatprep.subr.mxu0 0.0
          %417 = vmatpush1.msra.mxu0 0.0
          %418 = vmatprep.subr.mxu0 0.0
          %419 = vmatpush1.msra.mxu0 0.0
          %420 = vmatprep.subr.mxu0 0.0
          %421 = vmatpush1.msra.mxu0 0.0
          %422 = vmatprep.mubr.f32.mxu0 0.0
          %423 = vmatmul.mubr.f32.gmra.mrb[0].mxu0 %v352
          %v424 = vpop.f32.mrb[0].mxu0
          %v425 = vadd.f32 0.0, %v424
          %v426 = vpop.f32.mrb[0].mxu0
          %427 = vdwg.mxu0
          %vm428 = vcmask 25600
          %v429 = vsel %vm428, %v425, -inf
          %430 = vmax.xlane.f32.xlu0 %v429
          %v431 = vpop.xlane.xlu0 %430
          %v432 = vsub.f32 %v425, %v431
          %v433 = vmul.f32 %v432, 1.442695
          %v434 = vpow.pop %v433
          %v435 = vsel %vm428, %v434, 0.0
          %436 = vadd.xlane.f32.xlu0 %v435
          %v437 = vpop.xlane.xlu0 %436
          %v438 = vrcp.pop %v437
          %v439 = vmul.f32 %v434, %v438
          %440 = vst.msk [vmem:[#allocation6] sm:$0x3] %vm428, %v439
        $region48: #{tpu_custom_call.1} parent=35 // pred_fallthru
          _
        // Predicated region
        $region49: #{tpu_custom_call.1} parent=35 // pred_check
          %p441 = pneg %p140
        $region50: #{tpu_custom_call.1} parent=35 // pred_check_branch
          %443 = sbr.rel (%p441) target = $region52
        $region51: #{tpu_custom_call.1} parent=35 // pred_region
          %s445 = ssub.s32 32, 32
          %446 = vsyncadd [#allocation5], %s445
          %s447 = smul.addr %s23, 32
          %s448 = scalar_lea.hbm %s4, %s447
          %s450 = sshll.u32 [#allocation6], 4
          %s451 = int_to_ptr.vmem [resolvable:$true] %s450
          %453 = dma.vmem_to_hbm [thread:$0]  %s451, 32, %s448, [#allocation5]
        $region52: #{tpu_custom_call.1} parent=35 // pred_fallthru
          _
        // Predicated region
        $region53: #{tpu_custom_call.1} parent=35 // pred_check
          %p454 = pneg %p140
        $region54: #{tpu_custom_call.1} parent=35 // pred_check_branch
          %456 = sbr.rel (%p454) target = $region56
        $region55: #{tpu_custom_call.1} parent=35 // pred_region
          %457 = dma.done [#allocation5], 32
        $region56: #{tpu_custom_call.1} parent=35 // pred_fallthru
          _
      $region36: #{tpu_custom_call.1} parent=5 // pred_fallthru
        _
      %p458 = scmp.le.s32.totalorder 2, %s14
      // Predicated region
      $region57: #{tpu_custom_call.1} parent=5 // pred_check
        %p459 = pneg %p458
      $region58: #{tpu_custom_call.1} parent=5 // pred_check_branch
        %461 = sbr.rel (%p459) target = $region60
      $region59: #{tpu_custom_call.1} parent=5 // pred_region
        %s462 = ssub.s32 %s14, 2
      $region60: #{tpu_custom_call.1} parent=5 // pred_fallthru
        _
    $region6: #{tpu_custom_call.1} parent=1 // loop_footer
      %s18 = sadd.s32 1, %s14
    $region7: #{tpu_custom_call.1} parent=1 // loop_footer_branch
      %13 = sbr.rel target = $region3
    $region8: #{tpu_custom_call.1} parent=1 // loop_exit
      _
    %463 = vsyncpa [#allocation4], 1
    %s464 = scalar_lea.sflag [#allocation4], 1
    %465 = vsyncpa %s464, 1
    %466 = vsyncpa [#allocation5], 1
    %s467 = scalar_lea.sflag [#allocation5], 1
    %468 = vsyncpa %s467, 1

</llo_original>
